<compile_context>
chip_gen: v7x
topology: tpu7x:2x2x1
jax: 0.10.0
libtpu: 0.0.40
codegen_flags: <defaults>
</compile_context>

<pallas_src>
import functools
import math

import jax
import jax.numpy as jnp
from jax.experimental import pallas as pl
from jax.experimental.pallas import tpu as pltpu

RMS_EPS = 1e-6


def _round_up(a, b):
    return (a + b - 1) // b * b


# ----------------------------- host-side parameter prep -----------------------------
def ternary_weight(w):
    """weight_quant(w) = sign(w - mean(w)) * mean(|w|) -> (ternary codes, scalar scale)."""
    scale = jnp.mean(jnp.abs(w))
    tern = jnp.sign(w - jnp.mean(w))          # exactly {-1, 0, +1}
    return tern, scale


# --------------------------------- device queries ---------------------------------
def _tpu_generation():
    try:
        kind = jax.devices()[0].device_kind.lower()
    except Exception:
        return None
    for g in (7, 6, 5, 4, 3, 2):
        if ("v%d" % g) in kind or ("tpu%d" % g) in kind:
            return g
    return None


def _vmem_ceiling_bytes(gen):
    """Usable-VMEM ceiling: physical capacity minus headroom for Mosaic scratch."""
    cap = None
    try:
        cap = int(pltpu.get_tpu_info().vmem_capacity_bytes)
    except Exception:
        cap = None
    if not cap or cap <= 0:
        cap = (64 << 20) if (gen is not None and gen >= 7) else (128 << 20)
    return (cap * 13) // 16          # ~104 MiB of 128 MiB, ~52 MiB of 64 MiB


def _working_set_bytes(tile_n, dim, hidden, w_item, io_item, weight_bufs):
    wbuf = weight_bufs * 2 * dim * hidden * w_item            # w1t + w2t, per buffer
    io = 2 * tile_n * dim * 2 * io_item                       # double-buffered x + out
    interm = 6 * tile_n * hidden * 4 + 6 * tile_n * dim * 4   # f32 temporaries
    return wbuf + io + interm + (4 << 20)


# ----------------------------------- Pallas kernel -----------------------------------
def _rmsnorm_actquant_codes(v, eps, code_dtype):
    """SimpleRMSNorm + activation_quant; returns integer codes (exact in code_dtype)
    and the per-row code->value scale (maxabs / 127)."""
    vn = v * jax.lax.rsqrt(jnp.mean(v * v, axis=-1, keepdims=True) + eps)
    maxabs = jnp.maximum(jnp.max(jnp.abs(vn), axis=-1, keepdims=True), 1e-5)
    codes = jnp.clip(jnp.round(vn * (127.0 / maxabs)), -128.0, 127.0)
    return codes.astype(code_dtype), maxabs * (1.0 / 127.0)


def expert_kernel(scales_ref, x_ref, w1t_ref, w2t_ref, o_ref, *, code_dtype, acc_dtype):
    # scales_ref: (2,)            f32 SMEM   [mean|w1|, mean|w2|]
    # x_ref:      (tile_n, dim)   input tile (caller dtype)
    # w1t_ref:    (dim, hidden)   ternary codes (int8 or bf16), pre-transposed [in, out]
    # w2t_ref:    (hidden, dim)   ternary codes (int8 or bf16), pre-transposed [in, out]
    x = x_ref[...].astype(jnp.float32)
    w1_scale = scales_ref[0]
    w2_scale = scales_ref[1]

    # ---- BitLinear(dim -> 4*dim): exact integer-code matmul on the MXU ----
    q1, row_s1 = _rmsnorm_actquant_codes(x, RMS_EPS, code_dtype)
    h = jnp.dot(q1, w1t_ref[...], preferred_element_type=acc_dtype).astype(jnp.float32)

    # ---- ReLU (commutes with the positive per-row scale row_s1 * w1_scale) ----
    h = jnp.maximum(h, 0.0)

    # ---- BitLinear(4*dim -> dim) ----
    # The layer-1 output scale c = row_s1*w1_scale is NOT applied to h.  It is folded
    # exactly into the second RMSNorm's eps:
    #   rmsnorm_eps(c*h) == h * rsqrt(mean(h*h) + eps/c^2)
    # (c > 0 in practice; if mean|w1| == 0 the division yields +inf and the whole
    #  layer output is exactly 0, matching the reference.)
    c = row_s1 * w1_scale                       # (tile_n, 1) f32
    eps2 = RMS_EPS / (c * c)
    q2, row_s2 = _rmsnorm_actquant_codes(h, eps2, code_dtype)
    y = jnp.dot(q2, w2t_ref[...], preferred_element_type=acc_dtype).astype(jnp.float32)
    y = y * (row_s2 * w2_scale)

    # ---- Dropout(0.1): identity at inference ----
    o_ref[...] = y.astype(o_ref.dtype)


# ------------------------------------- wrapper --------------------------------------
def expert_forward(x, w1, w2, *, tile_n=None, use_int8=None, single_buffer_weights=None):
    """x: [..., dim]; w1: [4*dim, dim]; w2: [dim, 4*dim] (PyTorch nn.Linear layout)."""
    orig_shape = x.shape
    dim = orig_shape[-1]
    hidden = w1.shape[0]
    xf = x.reshape(-1, dim)
    n = xf.shape[0]

    gen = _tpu_generation()
    ceiling = _vmem_ceiling_bytes(gen)
    if use_int8 is None:
        # int8 MXU on v5e/v6e (2x rate, half weight bytes); v7x has no integer MXU,
        # so it keeps exact bf16 codes (fp8 would break the exact-integer invariant).
        use_int8 = gen in (5, 6)
    if single_buffer_weights is None:
        single_buffer_weights = hasattr(pl, "Buffered")

    io_item = jnp.dtype(x.dtype).itemsize
    w_item = 1 if use_int8 else 2

    # Generation / dim-aware row tile: large tiles amortize per-grid-step overhead;
    # smaller default on v7x protects its 64 MiB per-core VMEM.
    if tile_n is None:
        tile_n = 256 if (gen is not None and gen >= 7) else 512
        while tile_n > 64 and _working_set_bytes(
                tile_n, dim, hidden, w_item, io_item,
                1 if single_buffer_weights else 2) > ceiling:
            tile_n //= 2
    # Clamp to the (8-aligned) problem size so tiny inputs don't over-pad.
    tile_n = _round_up(max(8, min(tile_n, _round_up(n, 8))), 8)
    pad = (-n) % tile_n
    if pad:
        xf = jnp.pad(xf, ((0, pad), (0, 0)))
    n_pad = xf.shape[0]

    # Host-side weight quantization: ternary codes (exact) + scalar f32 scales,
    # pre-transposed to [in, out] so the kernel never transposes.
    w1_tern, s1 = ternary_weight(w1)
    w2_tern, s2 = ternary_weight(w2)
    scales = jnp.stack([s1, s2]).astype(jnp.float32)     # (2,) -> SMEM

    def run(single_buf, int8):
        code_dtype = jnp.int8 if int8 else jnp.bfloat16
        acc_dtype = jnp.int32 if int8 else jnp.float32
        w1t = w1_tern.T.astype(code_dtype)                # [dim, hidden]
        w2t = w2_tern.T.astype(code_dtype)                # [hidden, dim]
        wkw = dict(pipeline_mode=pl.Buffered(1)) if single_buf else {}

        need = _working_set_bytes(tile_n, dim, hidden, jnp.dtype(code_dtype).itemsize,
                                  io_item, 1 if single_buf else 2)
        vmem_limit = int(min(max(need, 32 << 20), ceiling))

        out = pl.pallas_call(
            functools.partial(expert_kernel, code_dtype=code_dtype, acc_dtype=acc_dtype),
            out_shape=jax.ShapeDtypeStruct((n_pad, dim), x.dtype),
            grid_spec=pltpu.PrefetchScalarGridSpec(
                num_scalar_prefetch=0,
                grid=(n_pad // tile_n,),
                in_specs=[
                    pl.BlockSpec(memory_space=pltpu.MemorySpace.SMEM),        # scales
                    pl.BlockSpec((tile_n, dim), lambda i: (i, 0)),            # x tile
                    pl.BlockSpec((dim, hidden), lambda i: (0, 0), **wkw),     # w1t (resident)
                    pl.BlockSpec((hidden, dim), lambda i: (0, 0), **wkw),     # w2t (resident)
                ],
                out_specs=pl.BlockSpec((tile_n, dim), lambda i: (i, 0)),
            ),
            compiler_params=pltpu.CompilerParams(
                dimension_semantics=("parallel",),
                vmem_limit_bytes=vmem_limit,
            ),
        )(scales, xf, w1t, w2t)
        return jax.block_until_ready(out)

    # Preferred config first; fall back to progressively more conservative configs if
    # a feature (Buffered(1) / int8 MXU) is rejected by the lowering on this chip.
    attempts = [(single_buffer_weights, use_int8)]
    if single_buffer_weights:
        attempts.append((False, use_int8))
    if use_int8:
        attempts.append((False, False))
    out, last_err = None, None
    for sb, i8 in attempts:
        try:
            out = run(sb, i8)
            break
        except Exception as e:  # noqa: BLE001 - conservative fallback, re-raised below
            last_err = e
            out = None
    if out is None:
        raise last_err

    return out[:n].reshape(orig_shape)


# ------------------------------ pure-JAX reference ---------------------------------
def expert_reference(x, w1, w2):
    def act_quant(v):
        scale = 127.0 / jnp.maximum(jnp.max(jnp.abs(v), axis=-1, keepdims=True), 1e-5)
        return jnp.clip(jnp.round(v * scale), -128.0, 127.0) / scale

    def rmsnorm(v):
        return v * jax.lax.rsqrt(jnp.mean(v * v, axis=-1, keepdims=True) + RMS_EPS)

    def bitlinear(v, w):
        wq = jnp.sign(w - jnp.mean(w)) * jnp.mean(jnp.abs(w))
        return act_quant(rmsnorm(v)) @ wq.T

    h = jnp.maximum(bitlinear(x, w1), 0.0)
    return bitlinear(h, w2)


if __name__ == "__main__":
    dim = 32          # Expert(dim=32) -> hidden = 4*dim = 128
    batch, seq = 2, 8

    key = jax.random.PRNGKey(0)
    kx, k1, k2 = jax.random.split(key, 3)

    # deterministic parameter init (nn.Linear(in, out).weight shape = [out, in])
    b1 = 1.0 / math.sqrt(dim)
    b2 = 1.0 / math.sqrt(4 * dim)
    w1 = jax.random.uniform(k1, (4 * dim, dim), jnp.float32, -b1, b1)
    w2 = jax.random.uniform(k2, (dim, 4 * dim), jnp.float32, -b2, b2)

    x = jax.random.normal(kx, (batch, seq, dim), jnp.float32)

    y = jax.block_until_ready(expert_forward(x, w1, w2))
    y_ref = expert_reference(x, w1, w2)

    assert y.shape == x.shape
    # Tolerance accounts for f32 rounding-order differences (post-matmul scale
    # application and the exact eps-fold of the inter-layer scale) around the 8-bit
    # fake-quant rounding boundaries.
    assert jnp.allclose(y, y_ref, atol=2e-3, rtol=2e-3), "mismatch vs JAX reference"

    print("KERNEL_OK")
</pallas_src>

<mosaic_0001>
module attributes {stable_mosaic.version = 11 : i64} {
  func.func @expert_kernel(%arg0: i32, %arg1: memref<2xf32, #tpu.memory_space<smem>>, %arg2: memref<16x32xf32, #tpu.memory_space<vmem>>, %arg3: memref<32x128xbf16, #tpu.memory_space<vmem>>, %arg4: memref<128x32xbf16, #tpu.memory_space<vmem>>, %arg5: memref<16x32xf32, #tpu.memory_space<vmem>>) attributes {dimension_semantics = [#tpu.dimension_semantics<parallel>], iteration_bounds = array<i64: 1>, scalar_prefetch = 0 : i64, scratch_operands = 0 : i64, tpu.core_type = #tpu.core_type<tc>, window_params = [{transform_indices = @transform_0, window_bounds = array<i64: 2>}, {transform_indices = @transform_1, window_bounds = array<i64: 16, 32>}, {pipeline_mode = #tpu.pipeline_mode<synchronous>, transform_indices = @transform_2, window_bounds = array<i64: 32, 128>}, {pipeline_mode = #tpu.pipeline_mode<synchronous>, transform_indices = @transform_3, window_bounds = array<i64: 128, 32>}, {transform_indices = @transform_4, window_bounds = array<i64: 16, 32>}]} {
    %c0 = arith.constant 0 : index
    %c0_0 = arith.constant 0 : index
    %0 = vector.load %arg2[%c0, %c0_0] : memref<16x32xf32, #tpu.memory_space<vmem>>, vector<16x32xf32>
    %c0_1 = arith.constant 0 : index
    %1 = memref.load %arg1[%c0_1] : memref<2xf32, #tpu.memory_space<smem>>
    %c1 = arith.constant 1 : index
    %2 = memref.load %arg1[%c1] : memref<2xf32, #tpu.memory_space<smem>>
    %3 = arith.mulf %0, %0 : vector<16x32xf32>
    %cst = arith.constant dense<0.000000e+00> : vector<16xf32>
    %4 = vector.multi_reduction <add>, %3, %cst [1] : vector<16x32xf32> to vector<16xf32>
    %5 = vector.shape_cast %4 : vector<16xf32> to vector<16x1xf32>
    %cst_2 = arith.constant 3.200000e+01 : f32
    %6 = vector.broadcast %cst_2 : f32 to vector<16x1xf32>
    %7 = arith.divf %5, %6 : vector<16x1xf32>
    %cst_3 = arith.constant 9.99999997E-7 : f32
    %8 = vector.broadcast %cst_3 : f32 to vector<16x1xf32>
    %9 = arith.addf %7, %8 : vector<16x1xf32>
    %10 = math.rsqrt %9 : vector<16x1xf32>
    %11 = vector.broadcast %10 : vector<16x1xf32> to vector<16x32xf32>
    %12 = arith.mulf %0, %11 : vector<16x32xf32>
    %13 = math.absf %12 : vector<16x32xf32>
    %cst_4 = arith.constant dense<0xFF800000> : vector<16xf32>
    %14 = vector.multi_reduction <maximumf>, %13, %cst_4 [1] : vector<16x32xf32> to vector<16xf32>
    %15 = vector.shape_cast %14 : vector<16xf32> to vector<16x1xf32>
    %cst_5 = arith.constant 9.99999974E-6 : f32
    %16 = vector.broadcast %cst_5 : f32 to vector<16x1xf32>
    %17 = arith.maximumf %15, %16 : vector<16x1xf32>
    %cst_6 = arith.constant 1.270000e+02 : f32
    %18 = vector.broadcast %cst_6 : f32 to vector<16x1xf32>
    %19 = arith.divf %18, %17 : vector<16x1xf32>
    %20 = vector.broadcast %19 : vector<16x1xf32> to vector<16x32xf32>
    %21 = arith.mulf %12, %20 : vector<16x32xf32>
    %22 = math.roundeven %21 : vector<16x32xf32>
    %cst_7 = arith.constant -1.280000e+02 : f32
    %cst_8 = arith.constant 1.270000e+02 : f32
    %23 = vector.broadcast %cst_7 : f32 to vector<16x32xf32>
    %24 = arith.maximumf %23, %22 : vector<16x32xf32>
    %25 = vector.broadcast %cst_8 : f32 to vector<16x32xf32>
    %26 = arith.minimumf %25, %24 : vector<16x32xf32>
    %27 = arith.truncf %26 : vector<16x32xf32> to vector<16x32xbf16>
    %cst_9 = arith.constant 0.00787401571 : f32
    %28 = vector.broadcast %cst_9 : f32 to vector<16x1xf32>
    %29 = arith.mulf %17, %28 : vector<16x1xf32>
    %c0_10 = arith.constant 0 : index
    %c0_11 = arith.constant 0 : index
    %30 = vector.load %arg3[%c0_10, %c0_11] : memref<32x128xbf16, #tpu.memory_space<vmem>>, vector<32x128xbf16>
    %cst_12 = arith.constant dense<0.000000e+00> : vector<16x128xf32>
    %31 = tpu.matmul %27, %30, %cst_12 {dimension_numbers = #tpu.dot_dimension_numbers<[1], [0], [0], [1], [0, 0, 1, 1], [], []>} : vector<16x32xbf16>, vector<32x128xbf16>, vector<16x128xf32> -> vector<16x128xf32>
    %cst_13 = arith.constant 0.000000e+00 : f32
    %32 = vector.broadcast %cst_13 : f32 to vector<16x128xf32>
    %33 = arith.maximumf %31, %32 : vector<16x128xf32>
    %34 = vector.broadcast %1 : f32 to vector<16x1xf32>
    %35 = arith.mulf %29, %34 : vector<16x1xf32>
    %36 = arith.mulf %35, %35 : vector<16x1xf32>
    %cst_14 = arith.constant 9.99999997E-7 : f32
    %37 = vector.broadcast %cst_14 : f32 to vector<16x1xf32>
    %38 = arith.divf %37, %36 : vector<16x1xf32>
    %39 = arith.mulf %33, %33 : vector<16x128xf32>
    %cst_15 = arith.constant dense<0.000000e+00> : vector<16xf32>
    %40 = vector.multi_reduction <add>, %39, %cst_15 [1] : vector<16x128xf32> to vector<16xf32>
    %41 = vector.shape_cast %40 : vector<16xf32> to vector<16x1xf32>
    %cst_16 = arith.constant 1.280000e+02 : f32
    %42 = vector.broadcast %cst_16 : f32 to vector<16x1xf32>
    %43 = arith.divf %41, %42 : vector<16x1xf32>
    %44 = arith.addf %43, %38 : vector<16x1xf32>
    %45 = math.rsqrt %44 : vector<16x1xf32>
    %46 = vector.broadcast %45 : vector<16x1xf32> to vector<16x128xf32>
    %47 = arith.mulf %33, %46 : vector<16x128xf32>
    %48 = math.absf %47 : vector<16x128xf32>
    %cst_17 = arith.constant dense<0xFF800000> : vector<16xf32>
    %49 = vector.multi_reduction <maximumf>, %48, %cst_17 [1] : vector<16x128xf32> to vector<16xf32>
    %50 = vector.shape_cast %49 : vector<16xf32> to vector<16x1xf32>
    %cst_18 = arith.constant 9.99999974E-6 : f32
    %51 = vector.broadcast %cst_18 : f32 to vector<16x1xf32>
    %52 = arith.maximumf %50, %51 : vector<16x1xf32>
    %cst_19 = arith.constant 1.270000e+02 : f32
    %53 = vector.broadcast %cst_19 : f32 to vector<16x1xf32>
    %54 = arith.divf %53, %52 : vector<16x1xf32>
    %55 = vector.broadcast %54 : vector<16x1xf32> to vector<16x128xf32>
    %56 = arith.mulf %47, %55 : vector<16x128xf32>
    %57 = math.roundeven %56 : vector<16x128xf32>
    %cst_20 = arith.constant -1.280000e+02 : f32
    %cst_21 = arith.constant 1.270000e+02 : f32
    %58 = vector.broadcast %cst_20 : f32 to vector<16x128xf32>
    %59 = arith.maximumf %58, %57 : vector<16x128xf32>
    %60 = vector.broadcast %cst_21 : f32 to vector<16x128xf32>
    %61 = arith.minimumf %60, %59 : vector<16x128xf32>
    %62 = arith.truncf %61 : vector<16x128xf32> to vector<16x128xbf16>
    %cst_22 = arith.constant 0.00787401571 : f32
    %63 = vector.broadcast %cst_22 : f32 to vector<16x1xf32>
    %64 = arith.mulf %52, %63 : vector<16x1xf32>
    %c0_23 = arith.constant 0 : index
    %c0_24 = arith.constant 0 : index
    %65 = vector.load %arg4[%c0_23, %c0_24] : memref<128x32xbf16, #tpu.memory_space<vmem>>, vector<128x32xbf16>
    %cst_25 = arith.constant dense<0.000000e+00> : vector<16x32xf32>
    %66 = tpu.matmul %62, %65, %cst_25 {dimension_numbers = #tpu.dot_dimension_numbers<[1], [0], [0], [1], [0, 0, 1, 1], [], []>} : vector<16x128xbf16>, vector<128x32xbf16>, vector<16x32xf32> -> vector<16x32xf32>
    %67 = vector.broadcast %2 : f32 to vector<16x1xf32>
    %68 = arith.mulf %64, %67 : vector<16x1xf32>
    %69 = vector.broadcast %68 : vector<16x1xf32> to vector<16x32xf32>
    %70 = arith.mulf %66, %69 : vector<16x32xf32>
    %c0_26 = arith.constant 0 : index
    %c0_27 = arith.constant 0 : index
    %71 = vector.load %arg5[%c0_26, %c0_27] : memref<16x32xf32, #tpu.memory_space<vmem>>, vector<16x32xf32>
    tpu.vector_store %arg5[%c0_26, %c0_27], %70 {strides = array<i32>} : memref<16x32xf32, #tpu.memory_space<vmem>>, vector<16x32xf32>,
    return
  }
  func.func @transform_0(%arg0: i32) -> i32 {
    %c0_i32 = arith.constant 0 : i32
    %c0_i32_0 = arith.constant 0 : i32
    return %c0_i32 : i32
  }
  func.func @transform_1(%arg0: i32) -> (i32, i32) {
    %c0_i32 = arith.constant 0 : i32
    %c0_i32_0 = arith.constant 0 : i32
    return %arg0, %c0_i32 : i32, i32
  }
  func.func @transform_2(%arg0: i32) -> (i32, i32) {
    %c0_i32 = arith.constant 0 : i32
    %c0_i32_0 = arith.constant 0 : i32
    %c0_i32_1 = arith.constant 0 : i32
    return %c0_i32, %c0_i32_0 : i32, i32
  }
  func.func @transform_3(%arg0: i32) -> (i32, i32) {
    %c0_i32 = arith.constant 0 : i32
    %c0_i32_0 = arith.constant 0 : i32
    %c0_i32_1 = arith.constant 0 : i32
    return %c0_i32, %c0_i32_0 : i32, i32
  }
  func.func @transform_4(%arg0: i32) -> (i32, i32) {
    %c0_i32 = arith.constant 0 : i32
    %c0_i32_0 = arith.constant 0 : i32
    return %arg0, %c0_i32 : i32, i32
  }
}

module attributes {stable_mosaic.version = 11 : i64} {
  func.func @expert_kernel(%arg0: i32, %arg1: memref<2xf32, #tpu.memory_space<smem>>, %arg2: memref<16x32xf32, #tpu.memory_space<vmem>>, %arg3: memref<32x128xbf16, #tpu.memory_space<vmem>>, %arg4: memref<128x32xbf16, #tpu.memory_space<vmem>>, %arg5: memref<16x32xf32, #tpu.memory_space<vmem>>) attributes {dimension_semantics = [#tpu.dimension_semantics<parallel>], iteration_bounds = array<i64: 1>, scalar_prefetch = 0 : i64, scratch_operands = 0 : i64, tpu.core_type = #tpu.core_type<tc>, window_params = [{transform_indices = @transform_0, window_bounds = array<i64: 2>}, {transform_indices = @transform_1, window_bounds = array<i64: 16, 32>}, {pipeline_mode = #tpu.pipeline_mode<synchronous>, transform_indices = @transform_2, window_bounds = array<i64: 32, 128>}, {pipeline_mode = #tpu.pipeline_mode<synchronous>, transform_indices = @transform_3, window_bounds = array<i64: 128, 32>}, {transform_indices = @transform_4, window_bounds = array<i64: 16, 32>}]} {
    %c0 = arith.constant 0 : index
    %c0_0 = arith.constant 0 : index
    %0 = vector.load %arg2[%c0, %c0_0] : memref<16x32xf32, #tpu.memory_space<vmem>>, vector<16x32xf32>
    %c0_1 = arith.constant 0 : index
    %1 = memref.load %arg1[%c0_1] : memref<2xf32, #tpu.memory_space<smem>>
    %c1 = arith.constant 1 : index
    %2 = memref.load %arg1[%c1] : memref<2xf32, #tpu.memory_space<smem>>
    %3 = arith.mulf %0, %0 : vector<16x32xf32>
    %cst = arith.constant dense<0.000000e+00> : vector<16xf32>
    %4 = vector.multi_reduction <add>, %3, %cst [1] : vector<16x32xf32> to vector<16xf32>
    %5 = vector.shape_cast %4 : vector<16xf32> to vector<16x1xf32>
    %cst_2 = arith.constant 3.200000e+01 : f32
    %6 = vector.broadcast %cst_2 : f32 to vector<16x1xf32>
    %7 = arith.divf %5, %6 : vector<16x1xf32>
    %cst_3 = arith.constant 9.99999997E-7 : f32
    %8 = vector.broadcast %cst_3 : f32 to vector<16x1xf32>
    %9 = arith.addf %7, %8 : vector<16x1xf32>
    %10 = math.rsqrt %9 : vector<16x1xf32>
    %11 = vector.broadcast %10 : vector<16x1xf32> to vector<16x32xf32>
    %12 = arith.mulf %0, %11 : vector<16x32xf32>
    %13 = math.absf %12 : vector<16x32xf32>
    %cst_4 = arith.constant dense<0xFF800000> : vector<16xf32>
    %14 = vector.multi_reduction <maximumf>, %13, %cst_4 [1] : vector<16x32xf32> to vector<16xf32>
    %15 = vector.shape_cast %14 : vector<16xf32> to vector<16x1xf32>
    %cst_5 = arith.constant 9.99999974E-6 : f32
    %16 = vector.broadcast %cst_5 : f32 to vector<16x1xf32>
    %17 = arith.maximumf %15, %16 : vector<16x1xf32>
    %cst_6 = arith.constant 1.270000e+02 : f32
    %18 = vector.broadcast %cst_6 : f32 to vector<16x1xf32>
    %19 = arith.divf %18, %17 : vector<16x1xf32>
    %20 = vector.broadcast %19 : vector<16x1xf32> to vector<16x32xf32>
    %21 = arith.mulf %12, %20 : vector<16x32xf32>
    %22 = math.roundeven %21 : vector<16x32xf32>
    %cst_7 = arith.constant -1.280000e+02 : f32
    %cst_8 = arith.constant 1.270000e+02 : f32
    %23 = vector.broadcast %cst_7 : f32 to vector<16x32xf32>
    %24 = arith.maximumf %23, %22 : vector<16x32xf32>
    %25 = vector.broadcast %cst_8 : f32 to vector<16x32xf32>
    %26 = arith.minimumf %25, %24 : vector<16x32xf32>
    %27 = arith.truncf %26 : vector<16x32xf32> to vector<16x32xbf16>
    %cst_9 = arith.constant 0.00787401571 : f32
    %28 = vector.broadcast %cst_9 : f32 to vector<16x1xf32>
    %29 = arith.mulf %17, %28 : vector<16x1xf32>
    %c0_10 = arith.constant 0 : index
    %c0_11 = arith.constant 0 : index
    %30 = vector.load %arg3[%c0_10, %c0_11] : memref<32x128xbf16, #tpu.memory_space<vmem>>, vector<32x128xbf16>
    %cst_12 = arith.constant dense<0.000000e+00> : vector<16x128xf32>
    %31 = tpu.matmul %27, %30, %cst_12 {dimension_numbers = #tpu.dot_dimension_numbers<[1], [0], [0], [1], [0, 0, 1, 1], [], []>} : vector<16x32xbf16>, vector<32x128xbf16>, vector<16x128xf32> -> vector<16x128xf32>
    %cst_13 = arith.constant 0.000000e+00 : f32
    %32 = vector.broadcast %cst_13 : f32 to vector<16x128xf32>
    %33 = arith.maximumf %31, %32 : vector<16x128xf32>
    %34 = vector.broadcast %1 : f32 to vector<16x1xf32>
    %35 = arith.mulf %29, %34 : vector<16x1xf32>
    %36 = arith.mulf %35, %35 : vector<16x1xf32>
    %cst_14 = arith.constant 9.99999997E-7 : f32
    %37 = vector.broadcast %cst_14 : f32 to vector<16x1xf32>
    %38 = arith.divf %37, %36 : vector<16x1xf32>
    %39 = arith.mulf %33, %33 : vector<16x128xf32>
    %cst_15 = arith.constant dense<0.000000e+00> : vector<16xf32>
    %40 = vector.multi_reduction <add>, %39, %cst_15 [1] : vector<16x128xf32> to vector<16xf32>
    %41 = vector.shape_cast %40 : vector<16xf32> to vector<16x1xf32>
    %cst_16 = arith.constant 1.280000e+02 : f32
    %42 = vector.broadcast %cst_16 : f32 to vector<16x1xf32>
    %43 = arith.divf %41, %42 : vector<16x1xf32>
    %44 = arith.addf %43, %38 : vector<16x1xf32>
    %45 = math.rsqrt %44 : vector<16x1xf32>
    %46 = vector.broadcast %45 : vector<16x1xf32> to vector<16x128xf32>
    %47 = arith.mulf %33, %46 : vector<16x128xf32>
    %48 = math.absf %47 : vector<16x128xf32>
    %cst_17 = arith.constant dense<0xFF800000> : vector<16xf32>
    %49 = vector.multi_reduction <maximumf>, %48, %cst_17 [1] : vector<16x128xf32> to vector<16xf32>
    %50 = vector.shape_cast %49 : vector<16xf32> to vector<16x1xf32>
    %cst_18 = arith.constant 9.99999974E-6 : f32
    %51 = vector.broadcast %cst_18 : f32 to vector<16x1xf32>
    %52 = arith.maximumf %50, %51 : vector<16x1xf32>
    %cst_19 = arith.constant 1.270000e+02 : f32
    %53 = vector.broadcast %cst_19 : f32 to vector<16x1xf32>
    %54 = arith.divf %53, %52 : vector<16x1xf32>
    %55 = vector.broadcast %54 : vector<16x1xf32> to vector<16x128xf32>
    %56 = arith.mulf %47, %55 : vector<16x128xf32>
    %57 = math.roundeven %56 : vector<16x128xf32>
    %cst_20 = arith.constant -1.280000e+02 : f32
    %cst_21 = arith.constant 1.270000e+02 : f32
    %58 = vector.broadcast %cst_20 : f32 to vector<16x128xf32>
    %59 = arith.maximumf %58, %57 : vector<16x128xf32>
    %60 = vector.broadcast %cst_21 : f32 to vector<16x128xf32>
    %61 = arith.minimumf %60, %59 : vector<16x128xf32>
    %62 = arith.truncf %61 : vector<16x128xf32> to vector<16x128xbf16>
    %cst_22 = arith.constant 0.00787401571 : f32
    %63 = vector.broadcast %cst_22 : f32 to vector<16x1xf32>
    %64 = arith.mulf %52, %63 : vector<16x1xf32>
    %c0_23 = arith.constant 0 : index
    %c0_24 = arith.constant 0 : index
    %65 = vector.load %arg4[%c0_23, %c0_24] : memref<128x32xbf16, #tpu.memory_space<vmem>>, vector<128x32xbf16>
    %cst_25 = arith.constant dense<0.000000e+00> : vector<16x32xf32>
    %66 = tpu.matmul %62, %65, %cst_25 {dimension_numbers = #tpu.dot_dimension_numbers<[1], [0], [0], [1], [0, 0, 1, 1], [], []>} : vector<16x128xbf16>, vector<128x32xbf16>, vector<16x32xf32> -> vector<16x32xf32>
    %67 = vector.broadcast %2 : f32 to vector<16x1xf32>
    %68 = arith.mulf %64, %67 : vector<16x1xf32>
    %69 = vector.broadcast %68 : vector<16x1xf32> to vector<16x32xf32>
    %70 = arith.mulf %66, %69 : vector<16x32xf32>
    %c0_26 = arith.constant 0 : index
    %c0_27 = arith.constant 0 : index
    %71 = vector.load %arg5[%c0_26, %c0_27] : memref<16x32xf32, #tpu.memory_space<vmem>>, vector<16x32xf32>
    tpu.vector_store %arg5[%c0_26, %c0_27], %70 {strides = array<i32>} : memref<16x32xf32, #tpu.memory_space<vmem>>, vector<16x32xf32>,
    return
  }
  func.func @transform_0(%arg0: i32) -> i32 {
    %c0_i32 = arith.constant 0 : i32
    %c0_i32_0 = arith.constant 0 : i32
    return %c0_i32 : i32
  }
  func.func @transform_1(%arg0: i32) -> (i32, i32) {
    %c0_i32 = arith.constant 0 : i32
    %c0_i32_0 = arith.constant 0 : i32
    return %arg0, %c0_i32 : i32, i32
  }
  func.func @transform_2(%arg0: i32) -> (i32, i32) {
    %c0_i32 = arith.constant 0 : i32
    %c0_i32_0 = arith.constant 0 : i32
    %c0_i32_1 = arith.constant 0 : i32
    return %c0_i32, %c0_i32_0 : i32, i32
  }
  func.func @transform_3(%arg0: i32) -> (i32, i32) {
    %c0_i32 = arith.constant 0 : i32
    %c0_i32_0 = arith.constant 0 : i32
    %c0_i32_1 = arith.constant 0 : i32
    return %c0_i32, %c0_i32_0 : i32, i32
  }
  func.func @transform_4(%arg0: i32) -> (i32, i32) {
    %c0_i32 = arith.constant 0 : i32
    %c0_i32_0 = arith.constant 0 : i32
    return %arg0, %c0_i32 : i32, i32
  }
}

</mosaic_0001>

<llo_original>
// kernel: tpu_custom_call.1
$region0: #{tpu_custom_call.1}
  #allocation0 [shape = 'u32[]', space=smem, size = 0x4, offset = 0x4, fixed_abs, tag = 'smem constant byte address 0x4 - core index']
  #allocation1 [shape = 'u32[144,128]{1,0:T(1,128)}', space=vmem, size = 0x12000, scoped, tag = 'internal scratch']
  %s0 = inlined_call_operand.vmem [shape: f32[2], index: 0, kind: input, shape index: {}]
  %s1 = inlined_call_operand.vmem [shape: f32[16,32], index: 1, kind: input, shape index: {}]
  %s2 = inlined_call_operand.vmem [shape: bf16[32,128], index: 2, kind: input, shape index: {}]
  %s3 = inlined_call_operand.vmem [shape: bf16[128,32], index: 3, kind: input, shape index: {}]
  %s4 = inlined_call_operand.hbm [shape: f32[16,32], index: 4, kind: output, shape index: {}]
  %s5 = sld [smem:[#allocation0]]
  $region30: #{tpu_custom_call.1} parent=0
    _
  %s7 = ssub.s32 1, %s5
  %s8 = scalar_select 0, %s7, %s5
  $region1: #{tpu_custom_call.1} parent=0
    #allocation2 [shape = 'u8[512]{0}', space=smem, size = 0x200, scoped, tag = 'input window, operand 0, single buffered']
    #allocation3 [shape = 's32[1]{0}', space=sflag, size = 0x4, scoped, tag = 'scoped memory for tpu_custom_call.1']
    #allocation4 [shape = 's32[1]{0}', space=sflag, size = 0x4, scoped, tag = 'scoped memory for tpu_custom_call.1']
    #allocation5 [shape = 'u8[8192]{0}', space=vmem, size = 0x2000, scoped, tag = 'output window, operand 0, single buffered']
    %9 = vsyncpa [#allocation4], 0
    %10 = vsyncpa [#allocation3], 0
    // Predicated region
    $region2: #{tpu_custom_call.1} parent=1 // pred_check
      _
    $region3: #{tpu_custom_call.1} parent=1 // pred_check_branch
      %12 = sbr.rel (0) target = $region5
    $region4: #{tpu_custom_call.1} parent=1 // pred_region
      %s14 = ssub.s32 16, 16
      %15 = vsyncadd [#allocation4], %s14
      %s17 = sshll.u32 %s0, 4
      %s18 = int_to_ptr.vmem [resolvable:$true] %s17
      %20 = dma.vmem_to_smem %s18, 16, [#allocation2], [#allocation4]
    $region5: #{tpu_custom_call.1} parent=1 // pred_fallthru
      _
    // Predicated region
    $region6: #{tpu_custom_call.1} parent=1 // pred_check
      _
    $region7: #{tpu_custom_call.1} parent=1 // pred_check_branch
      %22 = sbr.rel (0) target = $region9
    $region8: #{tpu_custom_call.1} parent=1 // pred_region
      _
    $region9: #{tpu_custom_call.1} parent=1 // pred_fallthru
      _
    // Predicated region
    $region10: #{tpu_custom_call.1} parent=1 // pred_check
      _
    $region11: #{tpu_custom_call.1} parent=1 // pred_check_branch
      %24 = sbr.rel (0) target = $region13
    $region12: #{tpu_custom_call.1} parent=1 // pred_region
      _
    $region13: #{tpu_custom_call.1} parent=1 // pred_fallthru
      _
    // Predicated region
    $region14: #{tpu_custom_call.1} parent=1 // pred_check
      _
    $region15: #{tpu_custom_call.1} parent=1 // pred_check_branch
      %26 = sbr.rel (0) target = $region17
    $region16: #{tpu_custom_call.1} parent=1 // pred_region
      _
    $region17: #{tpu_custom_call.1} parent=1 // pred_fallthru
      _
    // Predicated region
    $region18: #{tpu_custom_call.1} parent=1 // pred_check
      _
    $region19: #{tpu_custom_call.1} parent=1 // pred_check_branch
      %28 = sbr.rel (0) target = $region21
    $region20: #{tpu_custom_call.1} parent=1 // pred_region
      %29 = dma.done [#allocation4], 16
    $region21: #{tpu_custom_call.1} parent=1 // pred_fallthru
      _
    %30 = sfence
    %v32 = vld [vmem:[%s1] sm:$0xff]
    %v33 = vld [vmem:[%s1 + $0x8] sm:$0xff]
    %s34 = sld [smem:[#allocation2]]
    %s35 = sld [smem:[#allocation2 + $0x1]]
    %v36 = vmul.f32 %v32, %v32
    %v37 = vmul.f32 %v33, %v33
    %vm38 = vcmask 261120
    %v39 = vsel %vm38, %v36, 0.0
    %40 = vadd.xlane.f32.xlu0 %v39
    %v41 = vpop.xlane.xlu0 %40
    %v42 = vsel %vm38, %v37, 0.0
    %43 = vadd.xlane.f32.xlu0 %v42
    %v44 = vpop.xlane.xlu0 %43
    %v45 = vrcp.pop 32.0
    %v46 = vmul.f32 %v41, %v45
    %v47 = vmul.f32 %v44, %v45
    %v48 = vadd.f32 %v46, 1e-06
    %v49 = vadd.f32 %v47, 1e-06
    %v50 = vrsqrt.pop %v48
    %v51 = vrsqrt.pop %v49
    %v52 = vmul.f32 %v32, %v50
    %v53 = vmul.f32 %v33, %v51
    %v54 = vand.u32 2147483647, %v52
    %v55 = vand.u32 2147483647, %v53
    %v56 = vsel %vm38, %v54, -inf
    %57 = vmax.xlane.f32.xlu0 %v56
    %v58 = vpop.xlane.xlu0 %57
    %v59 = vsel %vm38, %v55, -inf
    %60 = vmax.xlane.f32.xlu0 %v59
    %v61 = vpop.xlane.xlu0 %60
    %v62 = vmax.f32 %v58, 1e-05
    %v63 = vmax.f32 %v61, 1e-05
    %v64 = vrcp.pop %v62
    %v65 = vmul.f32 127.0, %v64
    %v66 = vrcp.pop %v63
    %v67 = vmul.f32 127.0, %v66
    %v68 = vmul.f32 %v52, %v65
    %v69 = vmul.f32 %v53, %v67
    %v70 = vround.ne.pseudo %v68
    %v71 = vround.ne.pseudo %v69
    %v72 = vmax.f32 %v70, -128.0
    %v73 = vmax.f32 %v71, -128.0
    %v74 = vmin.f32 %v72, 127.0
    %v75 = vmin.f32 %v73, 127.0
    %v76 = vpack.c.bf16 %v75, %v74
    %v77 = vmul.f32 %v62, 0.007874016
    %v78 = vmul.f32 %v63, 0.007874016
    %v79 = vld [vmem:[%s2] sm:$0xf]
    %v80 = vld [vmem:[%s2 + $0x4] sm:$0xf]
    %v81 = vld [vmem:[%s2 + $0x8] sm:$0xf]
    %v82 = vld [vmem:[%s2 + $0xc] sm:$0xf]
    %v87 = vunpack.c.l.b16 %v79
    %v88 = vunpack.c.l.b16 %v80
    %v89 = vunpack.c.l.b16 %v81
    %v90 = vunpack.c.l.b16 %v82
    %v91 = vpack.c.b16 %v88, %v87
    %v92 = vpack.c.b16 %v90, %v89
    %v96 = vsel %vm38, %v76, 0
    %98 = vmatprep.subr.bf16.mxu0 0
    %99 = vmatpush1.bf16.msra.mxu0 %v91
    %100 = vmatprep.subr.bf16.mxu0 0
    %101 = vmatpush1.bf16.msra.mxu0 %v92
    %102 = vmatprep.subr.bf16.mxu0 0
    %103 = vmatpush1.bf16.msra.mxu0 0
    %104 = vmatprep.subr.bf16.mxu0 0
    %105 = vmatpush1.bf16.msra.mxu0 0
    %106 = vmatprep.subr.bf16.mxu0 0
    %107 = vmatpush1.bf16.msra.mxu0 0
    %108 = vmatprep.subr.bf16.mxu0 0
    %109 = vmatpush1.bf16.msra.mxu0 0
    %110 = vmatprep.subr.bf16.mxu0 0
    %111 = vmatpush1.bf16.msra.mxu0 0
    %112 = vmatprep.subr.bf16.mxu0 0
    %113 = vmatpush1.bf16.msra.mxu0 0
    %114 = vmatprep.subr.bf16.mxu0 0
    %115 = vmatpush1.bf16.msra.mxu0 0
    %116 = vmatprep.subr.bf16.mxu0 0
    %117 = vmatpush1.bf16.msra.mxu0 0
    %118 = vmatprep.subr.bf16.mxu0 0
    %119 = vmatpush1.bf16.msra.mxu0 0
    %120 = vmatprep.subr.bf16.mxu0 0
    %121 = vmatpush1.bf16.msra.mxu0 0
    %122 = vmatprep.subr.bf16.mxu0 0
    %123 = vmatpush1.bf16.msra.mxu0 0
    %124 = vmatprep.subr.bf16.mxu0 0
    %125 = vmatpush1.bf16.msra.mxu0 0
    %126 = vmatprep.subr.bf16.mxu0 0
    %127 = vmatpush1.bf16.msra.mxu0 0
    %128 = vmatprep.subr.bf16.mxu0 0
    %129 = vmatpush1.bf16.msra.mxu0 0
    %130 = vmatprep.mubr.bf16.mxu0 0
    %131 = vmatmul.mubr.bf16.gmra.mrb[0].mxu0 %v96
    %v132 = vpop.f32.mrb[0].mxu0
    %v133 = vadd.f32 0.0, %v132
    %v134 = vpop.f32.mrb[0].mxu0
    %v135 = vpop.f32.mrb[0].mxu0
    %v136 = vadd.f32 0.0, %v135
    %v137 = vpop.f32.mrb[0].mxu0
    %138 = vdwg.mxu0
    %v139 = vmax.f32 %v133, 0.0
    %v140 = vmax.f32 %v136, 0.0
    %v141 = vstv %s34
    %v142 = vmul.f32 %v77, %v141
    %v143 = vmul.f32 %v78, %v141
    %v144 = vmul.f32 %v142, %v142
    %v145 = vmul.f32 %v143, %v143
    %v146 = vrcp.pop %v144
    %v147 = vmul.f32 1e-06, %v146
    %v148 = vrcp.pop %v145
    %v149 = vmul.f32 1e-06, %v148
    %v150 = vmul.f32 %v139, %v139
    %v151 = vmul.f32 %v140, %v140
    %152 = vadd.xlane.f32.xlu0 %v150
    %v153 = vpop.xlane.xlu0 %152
    %154 = vadd.xlane.f32.xlu0 %v151
    %v155 = vpop.xlane.xlu0 %154
    %v156 = vrcp.pop 128.0
    %v157 = vmul.f32 %v153, %v156
    %v158 = vmul.f32 %v155, %v156
    %v159 = vadd.f32 %v157, %v147
    %v160 = vadd.f32 %v158, %v149
    %v161 = vrsqrt.pop %v159
    %v162 = vrsqrt.pop %v160
    %v163 = vmul.f32 %v139, %v161
    %v164 = vmul.f32 %v140, %v162
    %v165 = vand.u32 2147483647, %v163
    %v166 = vand.u32 2147483647, %v164
    %167 = vmax.xlane.f32.xlu0 %v165
    %v168 = vpop.xlane.xlu0 %167
    %169 = vmax.xlane.f32.xlu0 %v166
    %v170 = vpop.xlane.xlu0 %169
    %v171 = vmax.f32 %v168, 1e-05
    %v172 = vmax.f32 %v170, 1e-05
    %v173 = vrcp.pop %v171
    %v174 = vmul.f32 127.0, %v173
    %v175 = vrcp.pop %v172
    %v176 = vmul.f32 127.0, %v175
    %v177 = vmul.f32 %v163, %v174
    %v178 = vmul.f32 %v164, %v176
    %v179 = vround.ne.pseudo %v177
    %v180 = vround.ne.pseudo %v178
    %v181 = vmax.f32 %v179, -128.0
    %v182 = vmax.f32 %v180, -128.0
    %v183 = vmin.f32 %v181, 127.0
    %v184 = vmin.f32 %v182, 127.0
    %v185 = vpack.c.bf16 %v184, %v183
    %v186 = vmul.f32 %v171, 0.007874016
    %v187 = vmul.f32 %v172, 0.007874016
    %v188 = vld [vmem:[%s3] sm:$0xf]
    %v189 = vld [vmem:[%s3 + $0x4] sm:$0xf]
    %v190 = vld [vmem:[%s3 + $0x8] sm:$0xf]
    %v191 = vld [vmem:[%s3 + $0xc] sm:$0xf]
    %v192 = vld [vmem:[%s3 + $0x10] sm:$0xf]
    %v193 = vld [vmem:[%s3 + $0x14] sm:$0xf]
    %v194 = vld [vmem:[%s3 + $0x18] sm:$0xf]
    %v195 = vld [vmem:[%s3 + $0x1c] sm:$0xf]
    %v196 = vld [vmem:[%s3 + $0x20] sm:$0xf]
    %v197 = vld [vmem:[%s3 + $0x24] sm:$0xf]
    %v198 = vld [vmem:[%s3 + $0x28] sm:$0xf]
    %v199 = vld [vmem:[%s3 + $0x2c] sm:$0xf]
    %v200 = vld [vmem:[%s3 + $0x30] sm:$0xf]
    %v201 = vld [vmem:[%s3 + $0x34] sm:$0xf]
    %v202 = vld [vmem:[%s3 + $0x38] sm:$0xf]
    %v203 = vld [vmem:[%s3 + $0x3c] sm:$0xf]
    %v220 = vunpack.c.l.b16 %v188
    %v221 = vunpack.c.l.b16 %v189
    %v222 = vunpack.c.l.b16 %v190
    %v223 = vunpack.c.l.b16 %v191
    %v224 = vunpack.c.l.b16 %v192
    %v225 = vunpack.c.l.b16 %v193
    %v226 = vunpack.c.l.b16 %v194
    %v227 = vunpack.c.l.b16 %v195
    %v228 = vunpack.c.l.b16 %v196
    %v229 = vunpack.c.l.b16 %v197
    %v230 = vunpack.c.l.b16 %v198
    %v231 = vunpack.c.l.b16 %v199
    %v232 = vunpack.c.l.b16 %v200
    %v233 = vunpack.c.l.b16 %v201
    %v234 = vunpack.c.l.b16 %v202
    %v235 = vunpack.c.l.b16 %v203
    %v236 = vpack.c.b16 %v221, %v220
    %v237 = vpack.c.b16 %v223, %v222
    %v238 = vpack.c.b16 %v225, %v224
    %v239 = vpack.c.b16 %v227, %v226
    %v240 = vpack.c.b16 %v229, %v228
    %v241 = vpack.c.b16 %v231, %v230
    %v242 = vpack.c.b16 %v233, %v232
    %v243 = vpack.c.b16 %v235, %v234
    %252 = vmatprep.subr.bf16.mxu0 0
    %253 = vmatpush1.bf16.msra.mxu0 %v236
    %254 = vmatprep.subr.bf16.mxu0 0
    %255 = vmatpush1.bf16.msra.mxu0 %v237
    %256 = vmatprep.subr.bf16.mxu0 0
    %257 = vmatpush1.bf16.msra.mxu0 %v238
    %258 = vmatprep.subr.bf16.mxu0 0
    %259 = vmatpush1.bf16.msra.mxu0 %v239
    %260 = vmatprep.subr.bf16.mxu0 0
    %261 = vmatpush1.bf16.msra.mxu0 %v240
    %262 = vmatprep.subr.bf16.mxu0 0
    %263 = vmatpush1.bf16.msra.mxu0 %v241
    %264 = vmatprep.subr.bf16.mxu0 0
    %265 = vmatpush1.bf16.msra.mxu0 %v242
    %266 = vmatprep.subr.bf16.mxu0 0
    %267 = vmatpush1.bf16.msra.mxu0 %v243
    %268 = vmatprep.subr.bf16.mxu0 0
    %269 = vmatpush1.bf16.msra.mxu0 0
    %270 = vmatprep.subr.bf16.mxu0 0
    %271 = vmatpush1.bf16.msra.mxu0 0
    %272 = vmatprep.subr.bf16.mxu0 0
    %273 = vmatpush1.bf16.msra.mxu0 0
    %274 = vmatprep.subr.bf16.mxu0 0
    %275 = vmatpush1.bf16.msra.mxu0 0
    %276 = vmatprep.subr.bf16.mxu0 0
    %277 = vmatpush1.bf16.msra.mxu0 0
    %278 = vmatprep.subr.bf16.mxu0 0
    %279 = vmatpush1.bf16.msra.mxu0 0
    %280 = vmatprep.subr.bf16.mxu0 0
    %281 = vmatpush1.bf16.msra.mxu0 0
    %282 = vmatprep.subr.bf16.mxu0 0
    %283 = vmatpush1.bf16.msra.mxu0 0
    %284 = vmatprep.mubr.bf16.mxu0 0
    %285 = vmatmul.mubr.bf16.gmra.mrb[0].mxu0 %v185
    %v286 = vpop.f32.mrb[0].mxu0
    %v287 = vadd.f32 0.0, %v286
    %v288 = vpop.f32.mrb[0].mxu0
    %v289 = vpop.f32.mrb[0].mxu0
    %v290 = vadd.f32 0.0, %v289
    %v291 = vpop.f32.mrb[0].mxu0
    %292 = vdwg.mxu0
    %v293 = vstv %s35
    %v294 = vmul.f32 %v186, %v293
    %v295 = vmul.f32 %v187, %v293
    %v296 = vmul.f32 %v287, %v294
    %v297 = vmul.f32 %v290, %v295
    %298 = vst.msk [vmem:[#allocation5] sm:$0xff] %vm38, %v296
    %299 = vst.msk [vmem:[#allocation5 + $0x8] sm:$0xff] %vm38, %v297
    // Predicated region
    $region22: #{tpu_custom_call.1} parent=1 // pred_check
      _
    $region23: #{tpu_custom_call.1} parent=1 // pred_check_branch
      %301 = sbr.rel (0) target = $region25
    $region24: #{tpu_custom_call.1} parent=1 // pred_region
      %s303 = ssub.s32 256, 256
      %304 = vsyncadd [#allocation3], %s303
      %s305 = sshll.u32 [#allocation5], 4
      %s306 = int_to_ptr.vmem [resolvable:$true] %s305
      %311 = dma.vmem_to_hbm [thread:$0]  %s306, 256, %s4, [#allocation3], 128, 128, 8
    $region25: #{tpu_custom_call.1} parent=1 // pred_fallthru
      _
    // Predicated region
    $region26: #{tpu_custom_call.1} parent=1 // pred_check
      _
    $region27: #{tpu_custom_call.1} parent=1 // pred_check_branch
      %313 = sbr.rel (0) target = $region29
    $region28: #{tpu_custom_call.1} parent=1 // pred_region
      %314 = dma.done [#allocation3], 256
    $region29: #{tpu_custom_call.1} parent=1 // pred_fallthru
      _
    %315 = vsyncpa [#allocation3], 1
    %316 = vsyncpa [#allocation4], 1

// kernel: tpu_custom_call.1
$region0: #{tpu_custom_call.1}
  #allocation0 [shape = 'u32[]', space=smem, size = 0x4, offset = 0x4, fixed_abs, tag = 'smem constant byte address 0x4 - core index']
  #allocation1 [shape = 'u32[144,128]{1,0:T(1,128)}', space=vmem, size = 0x12000, scoped, tag = 'internal scratch']
  %s0 = inlined_call_operand.vmem [shape: f32[2], index: 0, kind: input, shape index: {}]
  %s1 = inlined_call_operand.vmem [shape: f32[16,32], index: 1, kind: input, shape index: {}]
  %s2 = inlined_call_operand.vmem [shape: bf16[32,128], index: 2, kind: input, shape index: {}]
  %s3 = inlined_call_operand.vmem [shape: bf16[128,32], index: 3, kind: input, shape index: {}]
  %s4 = inlined_call_operand.hbm [shape: f32[16,32], index: 4, kind: output, shape index: {}]
  %s5 = sld [smem:[#allocation0]]
  $region30: #{tpu_custom_call.1} parent=0
    _
  %s7 = ssub.s32 1, %s5
  %s8 = scalar_select 0, %s7, %s5
  $region1: #{tpu_custom_call.1} parent=0
    #allocation2 [shape = 'u8[512]{0}', space=smem, size = 0x200, scoped, tag = 'input window, operand 0, single buffered']
    #allocation3 [shape = 's32[1]{0}', space=sflag, size = 0x4, scoped, tag = 'scoped memory for tpu_custom_call.1']
    #allocation4 [shape = 's32[1]{0}', space=sflag, size = 0x4, scoped, tag = 'scoped memory for tpu_custom_call.1']
    #allocation5 [shape = 'u8[8192]{0}', space=vmem, size = 0x2000, scoped, tag = 'output window, operand 0, single buffered']
    %9 = vsyncpa [#allocation4], 0
    %10 = vsyncpa [#allocation3], 0
    // Predicated region
    $region2: #{tpu_custom_call.1} parent=1 // pred_check
      _
    $region3: #{tpu_custom_call.1} parent=1 // pred_check_branch
      %12 = sbr.rel (0) target = $region5
    $region4: #{tpu_custom_call.1} parent=1 // pred_region
      %s14 = ssub.s32 16, 16
      %15 = vsyncadd [#allocation4], %s14
      %s17 = sshll.u32 %s0, 4
      %s18 = int_to_ptr.vmem [resolvable:$true] %s17
      %20 = dma.vmem_to_smem %s18, 16, [#allocation2], [#allocation4]
    $region5: #{tpu_custom_call.1} parent=1 // pred_fallthru
      _
    // Predicated region
    $region6: #{tpu_custom_call.1} parent=1 // pred_check
      _
    $region7: #{tpu_custom_call.1} parent=1 // pred_check_branch
      %22 = sbr.rel (0) target = $region9
    $region8: #{tpu_custom_call.1} parent=1 // pred_region
      _
    $region9: #{tpu_custom_call.1} parent=1 // pred_fallthru
      _
    // Predicated region
    $region10: #{tpu_custom_call.1} parent=1 // pred_check
      _
    $region11: #{tpu_custom_call.1} parent=1 // pred_check_branch
      %24 = sbr.rel (0) target = $region13
    $region12: #{tpu_custom_call.1} parent=1 // pred_region
      _
    $region13: #{tpu_custom_call.1} parent=1 // pred_fallthru
      _
    // Predicated region
    $region14: #{tpu_custom_call.1} parent=1 // pred_check
      _
    $region15: #{tpu_custom_call.1} parent=1 // pred_check_branch
      %26 = sbr.rel (0) target = $region17
    $region16: #{tpu_custom_call.1} parent=1 // pred_region
      _
    $region17: #{tpu_custom_call.1} parent=1 // pred_fallthru
      _
    // Predicated region
    $region18: #{tpu_custom_call.1} parent=1 // pred_check
      _
    $region19: #{tpu_custom_call.1} parent=1 // pred_check_branch
      %28 = sbr.rel (0) target = $region21
    $region20: #{tpu_custom_call.1} parent=1 // pred_region
      %29 = dma.done [#allocation4], 16
    $region21: #{tpu_custom_call.1} parent=1 // pred_fallthru
      _
    %30 = sfence
    %v32 = vld [vmem:[%s1] sm:$0xff]
    %v33 = vld [vmem:[%s1 + $0x8] sm:$0xff]
    %s34 = sld [smem:[#allocation2]]
    %s35 = sld [smem:[#allocation2 + $0x1]]
    %v36 = vmul.f32 %v32, %v32
    %v37 = vmul.f32 %v33, %v33
    %vm38 = vcmask 261120
    %v39 = vsel %vm38, %v36, 0.0
    %40 = vadd.xlane.f32.xlu0 %v39
    %v41 = vpop.xlane.xlu0 %40
    %v42 = vsel %vm38, %v37, 0.0
    %43 = vadd.xlane.f32.xlu0 %v42
    %v44 = vpop.xlane.xlu0 %43
    %v45 = vrcp.pop 32.0
    %v46 = vmul.f32 %v41, %v45
    %v47 = vmul.f32 %v44, %v45
    %v48 = vadd.f32 %v46, 1e-06
    %v49 = vadd.f32 %v47, 1e-06
    %v50 = vrsqrt.pop %v48
    %v51 = vrsqrt.pop %v49
    %v52 = vmul.f32 %v32, %v50
    %v53 = vmul.f32 %v33, %v51
    %v54 = vand.u32 2147483647, %v52
    %v55 = vand.u32 2147483647, %v53
    %v56 = vsel %vm38, %v54, -inf
    %57 = vmax.xlane.f32.xlu0 %v56
    %v58 = vpop.xlane.xlu0 %57
    %v59 = vsel %vm38, %v55, -inf
    %60 = vmax.xlane.f32.xlu0 %v59
    %v61 = vpop.xlane.xlu0 %60
    %v62 = vmax.f32 %v58, 1e-05
    %v63 = vmax.f32 %v61, 1e-05
    %v64 = vrcp.pop %v62
    %v65 = vmul.f32 127.0, %v64
    %v66 = vrcp.pop %v63
    %v67 = vmul.f32 127.0, %v66
    %v68 = vmul.f32 %v52, %v65
    %v69 = vmul.f32 %v53, %v67
    %v70 = vround.ne.pseudo %v68
    %v71 = vround.ne.pseudo %v69
    %v72 = vmax.f32 %v70, -128.0
    %v73 = vmax.f32 %v71, -128.0
    %v74 = vmin.f32 %v72, 127.0
    %v75 = vmin.f32 %v73, 127.0
    %v76 = vpack.c.bf16 %v75, %v74
    %v77 = vmul.f32 %v62, 0.007874016
    %v78 = vmul.f32 %v63, 0.007874016
    %v79 = vld [vmem:[%s2] sm:$0xf]
    %v80 = vld [vmem:[%s2 + $0x4] sm:$0xf]
    %v81 = vld [vmem:[%s2 + $0x8] sm:$0xf]
    %v82 = vld [vmem:[%s2 + $0xc] sm:$0xf]
    %v87 = vunpack.c.l.b16 %v79
    %v88 = vunpack.c.l.b16 %v80
    %v89 = vunpack.c.l.b16 %v81
    %v90 = vunpack.c.l.b16 %v82
    %v91 = vpack.c.b16 %v88, %v87
    %v92 = vpack.c.b16 %v90, %v89
    %v96 = vsel %vm38, %v76, 0
    %98 = vmatprep.subr.bf16.mxu0 0
    %99 = vmatpush1.bf16.msra.mxu0 %v91
    %100 = vmatprep.subr.bf16.mxu0 0
    %101 = vmatpush1.bf16.msra.mxu0 %v92
    %102 = vmatprep.subr.bf16.mxu0 0
    %103 = vmatpush1.bf16.msra.mxu0 0
    %104 = vmatprep.subr.bf16.mxu0 0
    %105 = vmatpush1.bf16.msra.mxu0 0
    %106 = vmatprep.subr.bf16.mxu0 0
    %107 = vmatpush1.bf16.msra.mxu0 0
    %108 = vmatprep.subr.bf16.mxu0 0
    %109 = vmatpush1.bf16.msra.mxu0 0
    %110 = vmatprep.subr.bf16.mxu0 0
    %111 = vmatpush1.bf16.msra.mxu0 0
    %112 = vmatprep.subr.bf16.mxu0 0
    %113 = vmatpush1.bf16.msra.mxu0 0
    %114 = vmatprep.subr.bf16.mxu0 0
    %115 = vmatpush1.bf16.msra.mxu0 0
    %116 = vmatprep.subr.bf16.mxu0 0
    %117 = vmatpush1.bf16.msra.mxu0 0
    %118 = vmatprep.subr.bf16.mxu0 0
    %119 = vmatpush1.bf16.msra.mxu0 0
    %120 = vmatprep.subr.bf16.mxu0 0
    %121 = vmatpush1.bf16.msra.mxu0 0
    %122 = vmatprep.subr.bf16.mxu0 0
    %123 = vmatpush1.bf16.msra.mxu0 0
    %124 = vmatprep.subr.bf16.mxu0 0
    %125 = vmatpush1.bf16.msra.mxu0 0
    %126 = vmatprep.subr.bf16.mxu0 0
    %127 = vmatpush1.bf16.msra.mxu0 0
    %128 = vmatprep.subr.bf16.mxu0 0
    %129 = vmatpush1.bf16.msra.mxu0 0
    %130 = vmatprep.mubr.bf16.mxu0 0
    %131 = vmatmul.mubr.bf16.gmra.mrb[0].mxu0 %v96
    %v132 = vpop.f32.mrb[0].mxu0
    %v133 = vadd.f32 0.0, %v132
    %v134 = vpop.f32.mrb[0].mxu0
    %v135 = vpop.f32.mrb[0].mxu0
    %v136 = vadd.f32 0.0, %v135
    %v137 = vpop.f32.mrb[0].mxu0
    %138 = vdwg.mxu0
    %v139 = vmax.f32 %v133, 0.0
    %v140 = vmax.f32 %v136, 0.0
    %v141 = vstv %s34
    %v142 = vmul.f32 %v77, %v141
    %v143 = vmul.f32 %v78, %v141
    %v144 = vmul.f32 %v142, %v142
    %v145 = vmul.f32 %v143, %v143
    %v146 = vrcp.pop %v144
    %v147 = vmul.f32 1e-06, %v146
    %v148 = vrcp.pop %v145
    %v149 = vmul.f32 1e-06, %v148
    %v150 = vmul.f32 %v139, %v139
    %v151 = vmul.f32 %v140, %v140
    %152 = vadd.xlane.f32.xlu0 %v150
    %v153 = vpop.xlane.xlu0 %152
    %154 = vadd.xlane.f32.xlu0 %v151
    %v155 = vpop.xlane.xlu0 %154
    %v156 = vrcp.pop 128.0
    %v157 = vmul.f32 %v153, %v156
    %v158 = vmul.f32 %v155, %v156
    %v159 = vadd.f32 %v157, %v147
    %v160 = vadd.f32 %v158, %v149
    %v161 = vrsqrt.pop %v159
    %v162 = vrsqrt.pop %v160
    %v163 = vmul.f32 %v139, %v161
    %v164 = vmul.f32 %v140, %v162
    %v165 = vand.u32 2147483647, %v163
    %v166 = vand.u32 2147483647, %v164
    %167 = vmax.xlane.f32.xlu0 %v165
    %v168 = vpop.xlane.xlu0 %167
    %169 = vmax.xlane.f32.xlu0 %v166
    %v170 = vpop.xlane.xlu0 %169
    %v171 = vmax.f32 %v168, 1e-05
    %v172 = vmax.f32 %v170, 1e-05
    %v173 = vrcp.pop %v171
    %v174 = vmul.f32 127.0, %v173
    %v175 = vrcp.pop %v172
    %v176 = vmul.f32 127.0, %v175
    %v177 = vmul.f32 %v163, %v174
    %v178 = vmul.f32 %v164, %v176
    %v179 = vround.ne.pseudo %v177
    %v180 = vround.ne.pseudo %v178
    %v181 = vmax.f32 %v179, -128.0
    %v182 = vmax.f32 %v180, -128.0
    %v183 = vmin.f32 %v181, 127.0
    %v184 = vmin.f32 %v182, 127.0
    %v185 = vpack.c.bf16 %v184, %v183
    %v186 = vmul.f32 %v171, 0.007874016
    %v187 = vmul.f32 %v172, 0.007874016
    %v188 = vld [vmem:[%s3] sm:$0xf]
    %v189 = vld [vmem:[%s3 + $0x4] sm:$0xf]
    %v190 = vld [vmem:[%s3 + $0x8] sm:$0xf]
    %v191 = vld [vmem:[%s3 + $0xc] sm:$0xf]
    %v192 = vld [vmem:[%s3 + $0x10] sm:$0xf]
    %v193 = vld [vmem:[%s3 + $0x14] sm:$0xf]
    %v194 = vld [vmem:[%s3 + $0x18] sm:$0xf]
    %v195 = vld [vmem:[%s3 + $0x1c] sm:$0xf]
    %v196 = vld [vmem:[%s3 + $0x20] sm:$0xf]
    %v197 = vld [vmem:[%s3 + $0x24] sm:$0xf]
    %v198 = vld [vmem:[%s3 + $0x28] sm:$0xf]
    %v199 = vld [vmem:[%s3 + $0x2c] sm:$0xf]
    %v200 = vld [vmem:[%s3 + $0x30] sm:$0xf]
    %v201 = vld [vmem:[%s3 + $0x34] sm:$0xf]
    %v202 = vld [vmem:[%s3 + $0x38] sm:$0xf]
    %v203 = vld [vmem:[%s3 + $0x3c] sm:$0xf]
    %v220 = vunpack.c.l.b16 %v188
    %v221 = vunpack.c.l.b16 %v189
    %v222 = vunpack.c.l.b16 %v190
    %v223 = vunpack.c.l.b16 %v191
    %v224 = vunpack.c.l.b16 %v192
    %v225 = vunpack.c.l.b16 %v193
    %v226 = vunpack.c.l.b16 %v194
    %v227 = vunpack.c.l.b16 %v195
    %v228 = vunpack.c.l.b16 %v196
    %v229 = vunpack.c.l.b16 %v197
    %v230 = vunpack.c.l.b16 %v198
    %v231 = vunpack.c.l.b16 %v199
    %v232 = vunpack.c.l.b16 %v200
    %v233 = vunpack.c.l.b16 %v201
    %v234 = vunpack.c.l.b16 %v202
    %v235 = vunpack.c.l.b16 %v203
    %v236 = vpack.c.b16 %v221, %v220
    %v237 = vpack.c.b16 %v223, %v222
    %v238 = vpack.c.b16 %v225, %v224
    %v239 = vpack.c.b16 %v227, %v226
    %v240 = vpack.c.b16 %v229, %v228
    %v241 = vpack.c.b16 %v231, %v230
    %v242 = vpack.c.b16 %v233, %v232
    %v243 = vpack.c.b16 %v235, %v234
    %252 = vmatprep.subr.bf16.mxu0 0
    %253 = vmatpush1.bf16.msra.mxu0 %v236
    %254 = vmatprep.subr.bf16.mxu0 0
    %255 = vmatpush1.bf16.msra.mxu0 %v237
    %256 = vmatprep.subr.bf16.mxu0 0
    %257 = vmatpush1.bf16.msra.mxu0 %v238
    %258 = vmatprep.subr.bf16.mxu0 0
    %259 = vmatpush1.bf16.msra.mxu0 %v239
    %260 = vmatprep.subr.bf16.mxu0 0
    %261 = vmatpush1.bf16.msra.mxu0 %v240
    %262 = vmatprep.subr.bf16.mxu0 0
    %263 = vmatpush1.bf16.msra.mxu0 %v241
    %264 = vmatprep.subr.bf16.mxu0 0
    %265 = vmatpush1.bf16.msra.mxu0 %v242
    %266 = vmatprep.subr.bf16.mxu0 0
    %267 = vmatpush1.bf16.msra.mxu0 %v243
    %268 = vmatprep.subr.bf16.mxu0 0
    %269 = vmatpush1.bf16.msra.mxu0 0
    %270 = vmatprep.subr.bf16.mxu0 0
    %271 = vmatpush1.bf16.msra.mxu0 0
    %272 = vmatprep.subr.bf16.mxu0 0
    %273 = vmatpush1.bf16.msra.mxu0 0
    %274 = vmatprep.subr.bf16.mxu0 0
    %275 = vmatpush1.bf16.msra.mxu0 0
    %276 = vmatprep.subr.bf16.mxu0 0
    %277 = vmatpush1.bf16.msra.mxu0 0
    %278 = vmatprep.subr.bf16.mxu0 0
    %279 = vmatpush1.bf16.msra.mxu0 0
    %280 = vmatprep.subr.bf16.mxu0 0
    %281 = vmatpush1.bf16.msra.mxu0 0
    %282 = vmatprep.subr.bf16.mxu0 0
    %283 = vmatpush1.bf16.msra.mxu0 0
    %284 = vmatprep.mubr.bf16.mxu0 0
    %285 = vmatmul.mubr.bf16.gmra.mrb[0].mxu0 %v185
    %v286 = vpop.f32.mrb[0].mxu0
    %v287 = vadd.f32 0.0, %v286
    %v288 = vpop.f32.mrb[0].mxu0
    %v289 = vpop.f32.mrb[0].mxu0
    %v290 = vadd.f32 0.0, %v289
    %v291 = vpop.f32.mrb[0].mxu0
    %292 = vdwg.mxu0
    %v293 = vstv %s35
    %v294 = vmul.f32 %v186, %v293
    %v295 = vmul.f32 %v187, %v293
    %v296 = vmul.f32 %v287, %v294
    %v297 = vmul.f32 %v290, %v295
    %298 = vst.msk [vmem:[#allocation5] sm:$0xff] %vm38, %v296
    %299 = vst.msk [vmem:[#allocation5 + $0x8] sm:$0xff] %vm38, %v297
    // Predicated region
    $region22: #{tpu_custom_call.1} parent=1 // pred_check
      _
    $region23: #{tpu_custom_call.1} parent=1 // pred_check_branch
      %301 = sbr.rel (0) target = $region25
    $region24: #{tpu_custom_call.1} parent=1 // pred_region
      %s303 = ssub.s32 256, 256
      %304 = vsyncadd [#allocation3], %s303
      %s305 = sshll.u32 [#allocation5], 4
      %s306 = int_to_ptr.vmem [resolvable:$true] %s305
      %311 = dma.vmem_to_hbm [thread:$0]  %s306, 256, %s4, [#allocation3], 128, 128, 8
    $region25: #{tpu_custom_call.1} parent=1 // pred_fallthru
      _
    // Predicated region
    $region26: #{tpu_custom_call.1} parent=1 // pred_check
      _
    $region27: #{tpu_custom_call.1} parent=1 // pred_check_branch
      %313 = sbr.rel (0) target = $region29
    $region28: #{tpu_custom_call.1} parent=1 // pred_region
      %314 = dma.done [#allocation3], 256
    $region29: #{tpu_custom_call.1} parent=1 // pred_fallthru
      _
    %315 = vsyncpa [#allocation3], 1
    %316 = vsyncpa [#allocation4], 1

</llo_original>
